<compile_context>
chip_gen: v7x
topology: tpu7x:2x2x1
jax: 0.10.0
libtpu: 0.0.40
codegen_flags: <defaults>
</compile_context>

<pallas_src>
import functools

import jax
import jax.numpy as jnp
from jax.experimental import pallas as pl
from jax.experimental.pallas import tpu as pltpu

_LANE = 128
_SUBLANE = 8


def _cdiv(a, b):
    return -(-a // b)


def _round_up(a, b):
    return _cdiv(a, b) * b


def _row_align(itemsize):
    # Min sublane multiple per dtype width: f32 -> 8, 16-bit -> 16, 8-bit -> 32.
    return {1: 32, 2: 16}.get(itemsize, _SUBLANE)


def _make_kernel(block_rows, blocks_per_split, num_blocks, last_rows, n_splits):
    """Builds the reduction kernel as a closure over static tiling params."""
    fully_aligned = (last_rows == block_rows
                     and n_splits * blocks_per_split == num_blocks)

    def kernel(pre_ref, real_ref, mask_ref, abs_ref, cnt_ref):
        c = pl.program_id(0)
        i = pl.program_id(1)

        @pl.when(i == 0)
        def _init():
            abs_ref[...] = jnp.zeros_like(abs_ref)
            cnt_ref[...] = jnp.zeros_like(cnt_ref)

        def accumulate(keep=None):
            pre = pre_ref[...].astype(jnp.float32)
            real = real_ref[...].astype(jnp.float32)
            msk = mask_ref[...].astype(jnp.float32)
            # |pre*mask - real*mask| == |pre - real| * mask for a 0/1 mask.
            diff = jnp.abs(pre - real) * msk
            if keep is not None:
                # select (not multiply) so undefined data in the padded region
                # of a partial block can never poison the sums with NaN/Inf.
                diff = jnp.where(keep, diff, 0.0)
                msk = jnp.where(keep, msk, 0.0)
            # (BR,128) -> (BR/8, 8, 128); sum over the leading axis is a chain
            # of pure VPU vreg adds into the resident (8,128) output block.
            # (Per-lane partials keep the f32 add chain length at ~n/1024.)
            abs_ref[...] += diff.reshape(-1, _SUBLANE, _LANE).sum(axis=0)
            cnt_ref[...] += msk.reshape(-1, _SUBLANE, _LANE).sum(axis=0)

        if fully_aligned:
            accumulate()
        else:
            blk = c * blocks_per_split + i
            is_edge = blk >= num_blocks - 1

            @pl.when(jnp.logical_not(is_edge))
            def _full_block():
                accumulate()

            @pl.when(is_edge)
            def _edge_block():
                # Last real block has `last_rows` valid rows; a (rare) clamped
                # overhang step past num_blocks contributes nothing.
                valid = jnp.where(blk == num_blocks - 1, last_rows, 0)
                row_ids = jax.lax.broadcasted_iota(
                    jnp.int32, (block_rows, _LANE), 0)
                accumulate(keep=row_ids < valid)

    return kernel


@functools.partial(jax.jit, static_argnames=("block_rows_cap",))
def masked_l1_loss(pre_img, real_img, mask, block_rows_cap=None):
    assert pre_img.shape == real_img.shape == mask.shape
    n = pre_img.size

    if mask.dtype == jnp.bool_:
        mask = mask.astype(jnp.int8)  # avoid 1-bit loads inside the kernel

    # Free bitcast-reshapes; no wrapper-side dtype cast of the big arrays.
    pre_f = pre_img.reshape(-1)
    real_f = real_img.reshape(-1)
    mask_f = mask.reshape(-1)

    rows_total = n // _LANE       # full 128-lane rows handled by the kernel
    n_main = rows_total * _LANE   # only a < 128-element lane tail stays in JAX

    abs_sum = jnp.float32(0.0)
    counts = jnp.float32(0.0)

    if rows_total > 0:
        itemsizes = (pre_f.dtype.itemsize, real_f.dtype.itemsize,
                     mask_f.dtype.itemsize)
        row_align = max(_row_align(s) for s in itemsizes)

        # Trace-time VMEM capacity query -> biggest block whose double-buffered
        # input pipeline comfortably fits per-core VMEM on this generation.
        try:
            vmem_cap = int(getattr(pltpu.get_tpu_info(),
                                   "vmem_capacity_bytes", 64 << 20))
        except Exception:
            vmem_cap = 64 << 20   # v7x per-core size: safe floor everywhere
        bytes_per_row = _LANE * sum(itemsizes)
        budget = vmem_cap // 2    # 3 inputs x 2 pipeline buffers stay inside
        max_rows = max(row_align,
                       (budget // (2 * bytes_per_row)) // row_align * row_align)
        if block_rows_cap is not None:   # test hook: force small blocks
            max_rows = max(row_align,
                           min(max_rows,
                               (block_rows_cap // row_align) * row_align))

        # Pick an (almost always) even block count so the 2-way TensorCore
        # split has no redundant overhang step (harmless on 1-core chips).
        if rows_total >= 2 * row_align:
            nb_target = max(2, _cdiv(rows_total, max_rows))
            nb_target = _round_up(nb_target, 2)
        else:
            nb_target = 1
        block_rows = min(max_rows,
                         _round_up(_cdiv(rows_total, nb_target), row_align))
        num_blocks = _cdiv(rows_total, block_rows)
        last_rows = rows_total - (num_blocks - 1) * block_rows

        n_splits = 2 if num_blocks >= 2 else 1
        blocks_per_split = _cdiv(num_blocks, n_splits)
        has_overhang = n_splits * blocks_per_split != num_blocks

        kernel = _make_kernel(block_rows, blocks_per_split, num_blocks,
                              last_rows, n_splits)

        if has_overhang:
            def in_map(c, i):
                return (jnp.minimum(c * blocks_per_split + i, num_blocks - 1), 0)
        else:
            def in_map(c, i):
                return (c * blocks_per_split + i, 0)

        in_spec = pl.BlockSpec((block_rows, _LANE), in_map)
        out_spec = pl.BlockSpec((_SUBLANE, _LANE), lambda c, i: (c, 0))

        vmem_limit = int(min(vmem_cap,
                             2 * bytes_per_row * block_rows + (8 << 20)))

        def _rows(x):
            # Static check: the slice only exists when n % 128 != 0.
            x = x if n_main == n else x[:n_main]
            return x.reshape(rows_total, _LANE)

        abs_part, cnt_part = pl.pallas_call(
            kernel,
            out_shape=(
                jax.ShapeDtypeStruct((n_splits * _SUBLANE, _LANE), jnp.float32),
                jax.ShapeDtypeStruct((n_splits * _SUBLANE, _LANE), jnp.float32),
            ),
            grid_spec=pltpu.PrefetchScalarGridSpec(
                num_scalar_prefetch=0,
                grid=(n_splits, blocks_per_split),
                in_specs=[in_spec, in_spec, in_spec],
                out_specs=(out_spec, out_spec),
            ),
            compiler_params=pltpu.CompilerParams(
                dimension_semantics=("parallel", "arbitrary"),
                vmem_limit_bytes=vmem_limit),
        )(_rows(pre_f), _rows(real_f), _rows(mask_f))

        abs_sum = abs_sum + jnp.sum(abs_part)
        counts = counts + jnp.sum(cnt_part)

    if n_main < n:
        # < 128-element lane tail: tiny plain-JAX reduction.
        pre_t = pre_f[n_main:].astype(jnp.float32)
        real_t = real_f[n_main:].astype(jnp.float32)
        mask_t = mask_f[n_main:].astype(jnp.float32)
        abs_sum = abs_sum + jnp.sum(jnp.abs(pre_t - real_t) * mask_t)
        counts = counts + jnp.sum(mask_t)

    # counts == 0  ->  loss = 0   (scalar glue stays outside the kernel)
    return jnp.where(counts == 0, jnp.float32(0.0), abs_sum / counts)


def _reference(pre_img, real_img, mask):
    m = mask.astype(jnp.float32)
    counts = m.sum()
    s = jnp.sum(jnp.abs(pre_img.astype(jnp.float32) * m
                        - real_img.astype(jnp.float32) * m))
    return jnp.where(counts == 0, 0.0, s / counts)


if __name__ == "__main__":
    key = jax.random.PRNGKey(0)
    k1, k2, k3 = jax.random.split(key, 3)

    # NCHW, matching the PyTorch convention.
    N, C, H, W = 2, 4, 16, 16
    pre_img = jax.random.normal(k1, (N, C, H, W), dtype=jnp.float32)
    real_img = jax.random.normal(k2, (N, C, H, W), dtype=jnp.float32)
    mask = (jax.random.uniform(k3, (N, C, H, W)) > 0.5).astype(jnp.float32)

    loss = masked_l1_loss(pre_img, real_img, mask)
    jax.block_until_ready(loss)
    ref = _reference(pre_img, real_img, mask)
    assert jnp.allclose(loss, ref, rtol=1e-5, atol=1e-6), (loss, ref)

    # counts == 0 path.
    loss0 = masked_l1_loss(pre_img, real_img, jnp.zeros_like(mask))
    jax.block_until_ready(loss0)
    assert loss0 == 0.0

    # Narrow (int8) mask consumed end-to-end with no wrapper repack.
    loss_i8 = masked_l1_loss(pre_img, real_img, mask.astype(jnp.int8))
    jax.block_until_ready(loss_i8)
    assert jnp.allclose(loss_i8, ref, rtol=1e-5, atol=1e-6), (loss_i8, ref)

    # Unaligned total size: partial last block masked in-kernel; only the
    # 3-element lane tail (1155 % 128) goes through the plain-JAX path.
    k4, k5, k6 = jax.random.split(jax.random.PRNGKey(1), 3)
    shp = (3, 5, 7, 11)  # 1155 elements
    p2 = jax.random.normal(k4, shp, dtype=jnp.float32)
    r2 = jax.random.normal(k5, shp, dtype=jnp.float32)
    m2 = (jax.random.uniform(k6, shp) > 0.5).astype(jnp.float32)
    loss2 = masked_l1_loss(p2, r2, m2)
    jax.block_until_ready(loss2)
    ref2 = _reference(p2, r2, m2)
    assert jnp.allclose(loss2, ref2, rtol=1e-5, atol=1e-6), (loss2, ref2)

    # Two-way TensorCore split with a partial (masked) last block.
    k7, k8, k9 = jax.random.split(jax.random.PRNGKey(2), 3)
    shp3 = (2, 3, 40, 40)  # 9600 elements -> 75 rows -> 2 blocks of 40 rows
    p3 = jax.random.normal(k7, shp3, dtype=jnp.float32)
    r3 = jax.random.normal(k8, shp3, dtype=jnp.float32)
    m3 = (jax.random.uniform(k9, shp3) > 0.5).astype(jnp.float32)
    loss3 = masked_l1_loss(p3, r3, m3)
    jax.block_until_ready(loss3)
    ref3 = _reference(p3, r3, m3)
    assert jnp.allclose(loss3, ref3, rtol=1e-5, atol=1e-6), (loss3, ref3)

    # Forced small blocks -> odd block count -> clamped/guarded overhang step.
    kA, kB, kC = jax.random.split(jax.random.PRNGKey(3), 3)
    shp4 = (1, 3, 32, 32)  # 3072 elements -> 24 rows -> 3 blocks of 8 rows
    p4 = jax.random.normal(kA, shp4, dtype=jnp.float32)
    r4 = jax.random.normal(kB, shp4, dtype=jnp.float32)
    m4 = (jax.random.uniform(kC, shp4) > 0.5).astype(jnp.float32)
    loss4 = masked_l1_loss(p4, r4, m4, block_rows_cap=8)
    jax.block_until_ready(loss4)
    ref4 = _reference(p4, r4, m4)
    assert jnp.allclose(loss4, ref4, rtol=1e-5, atol=1e-6), (loss4, ref4)

    print("KERNEL_OK")
</pallas_src>

<mosaic_0001>
module attributes {stable_mosaic.version = 11 : i64} {
  func.func @kernel(%arg0: i32, %arg1: i32, %arg2: memref<8x128xf32, #tpu.memory_space<vmem>>, %arg3: memref<8x128xf32, #tpu.memory_space<vmem>>, %arg4: memref<8x128xf32, #tpu.memory_space<vmem>>, %arg5: memref<8x128xf32, #tpu.memory_space<vmem>>, %arg6: memref<8x128xf32, #tpu.memory_space<vmem>>) attributes {dimension_semantics = [#tpu.dimension_semantics<parallel>, #tpu.dimension_semantics<arbitrary>], iteration_bounds = array<i64: 2, 1>, scalar_prefetch = 0 : i64, scratch_operands = 0 : i64, tpu.core_type = #tpu.core_type<tc>, window_params = [{transform_indices = @transform_0, window_bounds = array<i64: 8, 128>}, {transform_indices = @transform_1, window_bounds = array<i64: 8, 128>}, {transform_indices = @transform_2, window_bounds = array<i64: 8, 128>}, {transform_indices = @transform_3, window_bounds = array<i64: 8, 128>}, {transform_indices = @transform_4, window_bounds = array<i64: 8, 128>}]} {
    %c0_i32 = arith.constant 0 : i32
    %0 = arith.cmpi eq, %arg1, %c0_i32 : i32
    %1 = arith.extui %0 : i1 to i32
    %c0_i32_0 = arith.constant 0 : i32
    %2 = arith.cmpi ne, %1, %c0_i32_0 : i32
    scf.if %2 {
      %cst_15 = arith.constant 0.000000e+00 : f32
      %19 = vector.broadcast %cst_15 : f32 to vector<8x128xf32>
      %c0_16 = arith.constant 0 : index
      %c0_17 = arith.constant 0 : index
      %20 = vector.load %arg5[%c0_16, %c0_17] : memref<8x128xf32, #tpu.memory_space<vmem>>, vector<8x128xf32>
      tpu.vector_store %arg5[%c0_16, %c0_17], %19 {strides = array<i32>} : memref<8x128xf32, #tpu.memory_space<vmem>>, vector<8x128xf32>,
      %cst_18 = arith.constant 0.000000e+00 : f32
      %21 = vector.broadcast %cst_18 : f32 to vector<8x128xf32>
      %c0_19 = arith.constant 0 : index
      %c0_20 = arith.constant 0 : index
      %22 = vector.load %arg6[%c0_19, %c0_20] : memref<8x128xf32, #tpu.memory_space<vmem>>, vector<8x128xf32>
      tpu.vector_store %arg6[%c0_19, %c0_20], %21 {strides = array<i32>} : memref<8x128xf32, #tpu.memory_space<vmem>>, vector<8x128xf32>,
    } else {
    }
    %c0 = arith.constant 0 : index
    %c0_1 = arith.constant 0 : index
    %3 = vector.load %arg2[%c0, %c0_1] : memref<8x128xf32, #tpu.memory_space<vmem>>, vector<8x128xf32>
    %c0_2 = arith.constant 0 : index
    %c0_3 = arith.constant 0 : index
    %4 = vector.load %arg3[%c0_2, %c0_3] : memref<8x128xf32, #tpu.memory_space<vmem>>, vector<8x128xf32>
    %c0_4 = arith.constant 0 : index
    %c0_5 = arith.constant 0 : index
    %5 = vector.load %arg4[%c0_4, %c0_5] : memref<8x128xf32, #tpu.memory_space<vmem>>, vector<8x128xf32>
    %6 = arith.subf %3, %4 : vector<8x128xf32>
    %7 = math.absf %6 : vector<8x128xf32>
    %8 = arith.mulf %7, %5 : vector<8x128xf32>
    %c0_6 = arith.constant 0 : index
    %c0_7 = arith.constant 0 : index
    %9 = vector.load %arg5[%c0_6, %c0_7] : memref<8x128xf32, #tpu.memory_space<vmem>>, vector<8x128xf32>
    %10 = vector.shape_cast %8 : vector<8x128xf32> to vector<1x8x128xf32>
    %cst = arith.constant dense<0.000000e+00> : vector<8x128xf32>
    %11 = vector.multi_reduction <add>, %10, %cst [0] : vector<1x8x128xf32> to vector<8x128xf32>
    %12 = arith.addf %9, %11 : vector<8x128xf32>
    %c0_8 = arith.constant 0 : index
    %c0_9 = arith.constant 0 : index
    %13 = vector.load %arg5[%c0_8, %c0_9] : memref<8x128xf32, #tpu.memory_space<vmem>>, vector<8x128xf32>
    tpu.vector_store %arg5[%c0_8, %c0_9], %12 {strides = array<i32>} : memref<8x128xf32, #tpu.memory_space<vmem>>, vector<8x128xf32>,
    %c0_10 = arith.constant 0 : index
    %c0_11 = arith.constant 0 : index
    %14 = vector.load %arg6[%c0_10, %c0_11] : memref<8x128xf32, #tpu.memory_space<vmem>>, vector<8x128xf32>
    %15 = vector.shape_cast %5 : vector<8x128xf32> to vector<1x8x128xf32>
    %cst_12 = arith.constant dense<0.000000e+00> : vector<8x128xf32>
    %16 = vector.multi_reduction <add>, %15, %cst_12 [0] : vector<1x8x128xf32> to vector<8x128xf32>
    %17 = arith.addf %14, %16 : vector<8x128xf32>
    %c0_13 = arith.constant 0 : index
    %c0_14 = arith.constant 0 : index
    %18 = vector.load %arg6[%c0_13, %c0_14] : memref<8x128xf32, #tpu.memory_space<vmem>>, vector<8x128xf32>
    tpu.vector_store %arg6[%c0_13, %c0_14], %17 {strides = array<i32>} : memref<8x128xf32, #tpu.memory_space<vmem>>, vector<8x128xf32>,
    return
  }
  func.func @transform_0(%arg0: i32, %arg1: i32) -> (i32, i32) {
    %c1_i32 = arith.constant 1 : i32
    %0 = arith.muli %arg0, %c1_i32 : i32
    %1 = arith.addi %0, %arg1 : i32
    %c0_i32 = arith.constant 0 : i32
    %c0_i32_0 = arith.constant 0 : i32
    return %1, %c0_i32 : i32, i32
  }
  func.func @transform_1(%arg0: i32, %arg1: i32) -> (i32, i32) {
    %c1_i32 = arith.constant 1 : i32
    %0 = arith.muli %arg0, %c1_i32 : i32
    %1 = arith.addi %0, %arg1 : i32
    %c0_i32 = arith.constant 0 : i32
    %c0_i32_0 = arith.constant 0 : i32
    return %1, %c0_i32 : i32, i32
  }
  func.func @transform_2(%arg0: i32, %arg1: i32) -> (i32, i32) {
    %c1_i32 = arith.constant 1 : i32
    %0 = arith.muli %arg0, %c1_i32 : i32
    %1 = arith.addi %0, %arg1 : i32
    %c0_i32 = arith.constant 0 : i32
    %c0_i32_0 = arith.constant 0 : i32
    return %1, %c0_i32 : i32, i32
  }
  func.func @transform_3(%arg0: i32, %arg1: i32) -> (i32, i32) {
    %c0_i32 = arith.constant 0 : i32
    %c0_i32_0 = arith.constant 0 : i32
    return %arg0, %c0_i32 : i32, i32
  }
  func.func @transform_4(%arg0: i32, %arg1: i32) -> (i32, i32) {
    %c0_i32 = arith.constant 0 : i32
    %c0_i32_0 = arith.constant 0 : i32
    return %arg0, %c0_i32 : i32, i32
  }
}

</mosaic_0001>

<llo_original>
// kernel: masked_l1_loss.1
$region0: #{masked_l1_loss.1}
  #allocation0 [shape = 'u32[]', space=smem, size = 0x4, offset = 0x4, fixed_abs, tag = 'smem constant byte address 0x4 - core index']
  #allocation1 [shape = 'u32[144,128]{1,0:T(1,128)}', space=vmem, size = 0x12000, scoped, tag = 'internal scratch']
  %s0 = inlined_call_operand.vmem [shape: f32[16,128], index: 0, kind: input, shape index: {}]
  %s1 = inlined_call_operand.vmem [shape: f32[16,128], index: 1, kind: input, shape index: {}]
  %s2 = inlined_call_operand.vmem [shape: f32[16,128], index: 2, kind: input, shape index: {}]
  %s3 = inlined_call_operand.vmem [shape: f32[16,128], index: 3, kind: output, shape index: {0}]
  %s4 = inlined_call_operand.vmem [shape: f32[16,128], index: 4, kind: output, shape index: {1}]
  %5 = xla_tuple %s3, %s4
  %s6 = sld [smem:[#allocation0]]
  $region57: #{masked_l1_loss.1} parent=0
    _
  %s8 = ssub.s32 1, %s6
  %s9 = scalar_select 0, %s8, %s6
  loop: start=0, step=1, limit=4
  $region2: #{masked_l1_loss.1} parent=0 // loop_pre_header
    _
  $region3: #{masked_l1_loss.1} parent=0 // loop_header
    %s11 = sphi 0, %s15
    %p12 = scmp.ge.s32.totalorder %s11, 4
    %s18 = sphi 0, %s30
    %s19 = sphi 0, %s26
    %s20 = sphi 0, %s18
    %s21 = sphi 0, %s19
    %s22 = sphi 0, %s20
    %s23 = sphi 0, %s21
    %s35 = sphi 0, %s37
    %s38 = sphi 0, %s35
    %s39 = sphi 0, %s38
    %s55 = sphi 0, %s39
    %s63 = sphi 0, %s65
    %s66 = sphi 0, %s63
    %s67 = sphi 0, %s66
    %s83 = sphi 0, %s67
    %s91 = sphi 0, %s93
    %s94 = sphi 0, %s91
    %s95 = sphi 0, %s94
    %s111 = sphi 0, %s95
    %s117 = sphi 0, %s119
    %s120 = sphi 0, %s117
    %s121 = sphi 0, %s120
    %s137 = sphi 0, %s121
    %s143 = sphi 0, %s145
    %s146 = sphi 0, %s143
    %s147 = sphi 0, %s146
    %s163 = sphi 0, %s147
  $region4: #{masked_l1_loss.1} parent=0 // loop_header_branch
    %14 = sbr.rel (%p12) target = $region8
  $region5: #{masked_l1_loss.1} parent=0 // loop_body
    %s16 = ssub.s32 %s11, 1
    %s17 = ssub.s32 %s11, 2
    %s24 = sadd.s32 1, %s19
    %p25 = scmp.ge.s32.totalorder %s24, 1
    %s26 = scalar_select %p25, 0, %s24
    %s27 = sadd.s32 1, %s18
    %s28 = scalar_select %p25, %s27, %s18
    %p29 = scmp.ge.s32.totalorder %s28, 2
    %s30 = scalar_select %p29, 0, %s28
    %s31 = sadd.s32 %s18, %s19
    %s32 = sadd.s32 %s30, %s26
    %s33 = ssub.s32 %s31, %s32
    %p34 = scmp.eq.s32.totalorder %s33, 0
    %s36 = sadd.s32 %s35, 1
    %s37 = scalar_select %p34, %s35, %s36
    %p40 = pneg %p34
    %p41 = scmp.eq.s32.totalorder %s11, 1
    %p42 = por %p40, %p41
    %p43 = scmp.ne.s32.totalorder %s35, %s38
    %p44 = scmp.eq.s32.totalorder %s11, 0
    %p45 = por %p43, %p44
    %p46 = scmp.ne.s32.totalorder %s35, %s38
    %p47 = scmp.eq.s32.totalorder %s16, 1
    %p48 = por %p46, %p47
    %p49 = scmp.ne.s32.totalorder %s38, %s39
    %p50 = scmp.eq.s32.totalorder %s16, 0
    %p51 = por %p49, %p50
    %p52 = scmp.ne.s32.totalorder %s38, %s39
    %p53 = scmp.eq.s32.totalorder %s17, 1
    %p54 = por %p52, %p53
    %p56 = scmp.ne.s32.totalorder %s39, %s55
    %p57 = scmp.eq.s32.totalorder %s17, 0
    %p58 = por %p56, %p57
    %s59 = sadd.s32 %s18, %s19
    %s60 = sadd.s32 %s30, %s26
    %s61 = ssub.s32 %s59, %s60
    %p62 = scmp.eq.s32.totalorder %s61, 0
    %s64 = sadd.s32 %s63, 1
    %s65 = scalar_select %p62, %s63, %s64
    %p68 = pneg %p62
    %p69 = scmp.eq.s32.totalorder %s11, 1
    %p70 = por %p68, %p69
    %p71 = scmp.ne.s32.totalorder %s63, %s66
    %p72 = scmp.eq.s32.totalorder %s11, 0
    %p73 = por %p71, %p72
    %p74 = scmp.ne.s32.totalorder %s63, %s66
    %p75 = scmp.eq.s32.totalorder %s16, 1
    %p76 = por %p74, %p75
    %p77 = scmp.ne.s32.totalorder %s66, %s67
    %p78 = scmp.eq.s32.totalorder %s16, 0
    %p79 = por %p77, %p78
    %p80 = scmp.ne.s32.totalorder %s66, %s67
    %p81 = scmp.eq.s32.totalorder %s17, 1
    %p82 = por %p80, %p81
    %p84 = scmp.ne.s32.totalorder %s67, %s83
    %p85 = scmp.eq.s32.totalorder %s17, 0
    %p86 = por %p84, %p85
    %s87 = sadd.s32 %s18, %s19
    %s88 = sadd.s32 %s30, %s26
    %s89 = ssub.s32 %s87, %s88
    %p90 = scmp.eq.s32.totalorder %s89, 0
    %s92 = sadd.s32 %s91, 1
    %s93 = scalar_select %p90, %s91, %s92
    %p96 = pneg %p90
    %p97 = scmp.eq.s32.totalorder %s11, 1
    %p98 = por %p96, %p97
    %p99 = scmp.ne.s32.totalorder %s91, %s94
    %p100 = scmp.eq.s32.totalorder %s11, 0
    %p101 = por %p99, %p100
    %p102 = scmp.ne.s32.totalorder %s91, %s94
    %p103 = scmp.eq.s32.totalorder %s16, 1
    %p104 = por %p102, %p103
    %p105 = scmp.ne.s32.totalorder %s94, %s95
    %p106 = scmp.eq.s32.totalorder %s16, 0
    %p107 = por %p105, %p106
    %p108 = scmp.ne.s32.totalorder %s94, %s95
    %p109 = scmp.eq.s32.totalorder %s17, 1
    %p110 = por %p108, %p109
    %p112 = scmp.ne.s32.totalorder %s95, %s111
    %p113 = scmp.eq.s32.totalorder %s17, 0
    %p114 = por %p112, %p113
    %s115 = ssub.s32 %s18, %s30
    %p116 = scmp.eq.s32.totalorder %s115, 0
    %s118 = sadd.s32 %s117, 1
    %s119 = scalar_select %p116, %s117, %s118
    %p122 = pneg %p116
    %p123 = scmp.eq.s32.totalorder %s11, 1
    %p124 = por %p122, %p123
    %p125 = scmp.ne.s32.totalorder %s117, %s120
    %p126 = scmp.eq.s32.totalorder %s11, 0
    %p127 = por %p125, %p126
    %p128 = scmp.ne.s32.totalorder %s117, %s120
    %p129 = scmp.eq.s32.totalorder %s16, 1
    %p130 = por %p128, %p129
    %p131 = scmp.ne.s32.totalorder %s120, %s121
    %p132 = scmp.eq.s32.totalorder %s16, 0
    %p133 = por %p131, %p132
    %p134 = scmp.ne.s32.totalorder %s120, %s121
    %p135 = scmp.eq.s32.totalorder %s17, 1
    %p136 = por %p134, %p135
    %p138 = scmp.ne.s32.totalorder %s121, %s137
    %p139 = scmp.eq.s32.totalorder %s17, 0
    %p140 = por %p138, %p139
    %s141 = ssub.s32 %s18, %s30
    %p142 = scmp.eq.s32.totalorder %s141, 0
    %s144 = sadd.s32 %s143, 1
    %s145 = scalar_select %p142, %s143, %s144
    %p148 = pneg %p142
    %p149 = scmp.eq.s32.totalorder %s11, 1
    %p150 = por %p148, %p149
    %p151 = scmp.ne.s32.totalorder %s143, %s146
    %p152 = scmp.eq.s32.totalorder %s11, 0
    %p153 = por %p151, %p152
    %p154 = scmp.ne.s32.totalorder %s143, %s146
    %p155 = scmp.eq.s32.totalorder %s16, 1
    %p156 = por %p154, %p155
    %p157 = scmp.ne.s32.totalorder %s146, %s147
    %p158 = scmp.eq.s32.totalorder %s16, 0
    %p159 = por %p157, %p158
    %p160 = scmp.ne.s32.totalorder %s146, %s147
    %p161 = scmp.eq.s32.totalorder %s17, 1
    %p162 = por %p160, %p161
    %p164 = scmp.ne.s32.totalorder %s147, %s163
    %p165 = scmp.eq.s32.totalorder %s17, 0
    %p166 = por %p164, %p165
    %p167 = scmp.le.s32.totalorder 1, %s11
    %p168 = scmp.lt.s32.totalorder %s11, 3
    %p169 = pnand %p167, %p168
    %p170 = pneg %p169
    // Predicated region
    $region9: #{masked_l1_loss.1} parent=5 // pred_check
      _
    $region10: #{masked_l1_loss.1} parent=5 // pred_check_branch
      %172 = sbr.rel (%p169) target = $region12
    $region11: #{masked_l1_loss.1} parent=5 // pred_region
      %s173 = ssub.s32 %s11, 1
    $region12: #{masked_l1_loss.1} parent=5 // pred_fallthru
      _
    %p174 = scmp.lt.s32.totalorder %s11, 2
    // Predicated region
    $region13: #{masked_l1_loss.1} parent=5 // pred_check
      %p175 = pneg %p174
    $region14: #{masked_l1_loss.1} parent=5 // pred_check_branch
      %177 = sbr.rel (%p175) target = $region16
    $region15: #{masked_l1_loss.1} parent=5 // pred_region
      // Predicated region
      $region17: #{masked_l1_loss.1} parent=15 // pred_check
        %p178 = pneg %p45
      $region18: #{masked_l1_loss.1} parent=15 // pred_check_branch
        %180 = sbr.rel (%p178) target = $region20
      $region19: #{masked_l1_loss.1} parent=15 // pred_region
        %s181 = sadd.s32 %s18, %s19
        %p182 = scmp.lt.s32.totalorder %s181, 1
        %s183 = scalar_select %p182, %s181, 1
        %s184 = smul.addr %s183, 8
        %s185 = scalar_lea.vmem %s0, %s184
        %s186 = sadd.s32 %s18, %s19
      $region20: #{masked_l1_loss.1} parent=15 // pred_fallthru
        _
      // Predicated region
      $region21: #{masked_l1_loss.1} parent=15 // pred_check
        %p187 = pneg %p73
      $region22: #{masked_l1_loss.1} parent=15 // pred_check_branch
        %189 = sbr.rel (%p187) target = $region24
      $region23: #{masked_l1_loss.1} parent=15 // pred_region
        %s190 = sadd.s32 %s18, %s19
        %p191 = scmp.lt.s32.totalorder %s190, 1
        %s192 = scalar_select %p191, %s190, 1
        %s193 = smul.addr %s192, 8
        %s194 = scalar_lea.vmem %s1, %s193
        %s195 = sadd.s32 %s18, %s19
      $region24: #{masked_l1_loss.1} parent=15 // pred_fallthru
        _
      // Predicated region
      $region25: #{masked_l1_loss.1} parent=15 // pred_check
        %p196 = pneg %p101
      $region26: #{masked_l1_loss.1} parent=15 // pred_check_branch
        %198 = sbr.rel (%p196) target = $region28
      $region27: #{masked_l1_loss.1} parent=15 // pred_region
        %s199 = sadd.s32 %s18, %s19
        %p200 = scmp.lt.s32.totalorder %s199, 1
        %s201 = scalar_select %p200, %s199, 1
        %s202 = smul.addr %s201, 8
        %s203 = scalar_lea.vmem %s2, %s202
        %s204 = sadd.s32 %s18, %s19
      $region28: #{masked_l1_loss.1} parent=15 // pred_fallthru
        _
    $region16: #{masked_l1_loss.1} parent=5 // pred_fallthru
      _
    %p205 = scmp.le.s32.totalorder 1, %s11
    %p206 = scmp.lt.s32.totalorder %s11, 3
    %p207 = pnand %p205, %p206
    %p208 = pneg %p207
    // Predicated region
    $region29: #{masked_l1_loss.1} parent=5 // pred_check
      _
    $region30: #{masked_l1_loss.1} parent=5 // pred_check_branch
      %210 = sbr.rel (%p207) target = $region32
    $region31: #{masked_l1_loss.1} parent=5 // pred_region
      %s211 = ssub.s32 %s11, 1
      %s212 = sadd.s32 %s20, %s21
      %p213 = scmp.lt.s32.totalorder %s212, 1
      %s214 = scalar_select %p213, %s212, 1
      %s215 = smul.addr %s214, 8
      %s216 = scalar_lea.vmem %s0, %s215
      %p217 = pneg %p51
      %p218 = pneg %p48
      %s219 = sadd.s32 %s20, %s21
      %p220 = scmp.lt.s32.totalorder %s219, 1
      %s221 = scalar_select %p220, %s219, 1
      %s222 = smul.addr %s221, 8
      %s223 = scalar_lea.vmem %s1, %s222
      %p224 = pneg %p79
      %p225 = pneg %p76
      %s226 = sadd.s32 %s20, %s21
      %p227 = scmp.lt.s32.totalorder %s226, 1
      %s228 = scalar_select %p227, %s226, 1
      %s229 = smul.addr %s228, 8
      %s230 = scalar_lea.vmem %s2, %s229
      %p231 = pneg %p107
      %p232 = pneg %p104
      %p233 = pneg %p133
      %p234 = pneg %p130
      %p235 = scmp.lt.s32.totalorder %s20, 1
      %s236 = scalar_select %p235, %s20, 1
      %s237 = smul.addr %s236, 8
      %s238 = scalar_lea.vmem %s3, %s237
      %p239 = pneg %p159
      %p240 = pneg %p156
      %p241 = scmp.lt.s32.totalorder %s20, 1
      %s242 = scalar_select %p241, %s20, 1
      %s243 = smul.addr %s242, 8
      %s244 = scalar_lea.vmem %s4, %s243
      %s245 = sadd.s32 %s20, %s21
      %p246 = scmp.lt.s32.totalorder %s245, 1
      %s247 = scalar_select %p246, %s245, 1
      %s248 = smul.addr %s247, 8
      %s249 = scalar_lea.vmem %s0, %s248
      %s250 = sadd.s32 %s20, %s21
      %s251 = sadd.s32 %s20, %s21
      %p252 = scmp.lt.s32.totalorder %s251, 1
      %s253 = scalar_select %p252, %s251, 1
      %s254 = smul.addr %s253, 8
      %s255 = scalar_lea.vmem %s1, %s254
      %s256 = sadd.s32 %s20, %s21
      %s257 = sadd.s32 %s20, %s21
      %p258 = scmp.lt.s32.totalorder %s257, 1
      %s259 = scalar_select %p258, %s257, 1
      %s260 = smul.addr %s259, 8
      %s261 = scalar_lea.vmem %s2, %s260
      %s262 = sadd.s32 %s20, %s21
      %p263 = scmp.lt.s32.totalorder %s20, 1
      %s264 = scalar_select %p263, %s20, 1
      %s265 = smul.addr %s264, 8
      %s266 = scalar_lea.vmem %s3, %s265
      %p267 = scmp.lt.s32.totalorder %s20, 1
      %s268 = scalar_select %p267, %s20, 1
      %s269 = smul.addr %s268, 8
      %s270 = scalar_lea.vmem %s4, %s269
      %p271 = scmp.eq.s32.totalorder %s21, 0
      // Predicated region
      $region33: #{masked_l1_loss.1} parent=31 // pred_check
        %p272 = pneg %p271
      $region34: #{masked_l1_loss.1} parent=31 // pred_check_branch
        %274 = sbr.rel (%p272) target = $region36
      $region35: #{masked_l1_loss.1} parent=31 // pred_region
        %275 = vst [vmem:[%s266] sm:$0xff] 0.0
        %276 = vst [vmem:[%s270] sm:$0xff] 0.0
      $region36: #{masked_l1_loss.1} parent=31 // pred_fallthru
        _
      %v277 = vld [vmem:[%s249] sm:$0xff]
      %v278 = vld [vmem:[%s255] sm:$0xff]
      %v279 = vld [vmem:[%s261] sm:$0xff]
      %v280 = vsub.f32 %v277, %v278
      %v281 = vand.u32 2147483647, %v280
      %v282 = vmul.f32 %v281, %v279
      %v283 = vld [vmem:[%s266] sm:$0xff]
      %v284 = vadd.f32 %v282, 0.0
      %v285 = vadd.f32 %v283, %v284
      %286 = vst [vmem:[%s266] sm:$0xff] %v285
      %v287 = vld [vmem:[%s270] sm:$0xff]
      %v288 = vadd.f32 %v279, 0.0
      %v289 = vadd.f32 %v287, %v288
      %290 = vst [vmem:[%s270] sm:$0xff] %v289
      %p291 = scmp.lt.s32.totalorder %s20, 1
      %s292 = scalar_select %p291, %s20, 1
      %s293 = smul.addr %s292, 8
      %s294 = scalar_lea.vmem %s3, %s293
      %p295 = scmp.lt.s32.totalorder %s20, 1
      %s296 = scalar_select %p295, %s20, 1
      %s297 = smul.addr %s296, 8
      %s298 = scalar_lea.vmem %s4, %s297
      // Predicated region
      $region37: #{masked_l1_loss.1} parent=31 // pred_check
        %p299 = pneg %p130
      $region38: #{masked_l1_loss.1} parent=31 // pred_check_branch
        %301 = sbr.rel (%p299) target = $region40
      $region39: #{masked_l1_loss.1} parent=31 // pred_region
        _
      $region40: #{masked_l1_loss.1} parent=31 // pred_fallthru
        _
      // Predicated region
      $region41: #{masked_l1_loss.1} parent=31 // pred_check
        %p302 = pneg %p156
      $region42: #{masked_l1_loss.1} parent=31 // pred_check_branch
        %304 = sbr.rel (%p302) target = $region44
      $region43: #{masked_l1_loss.1} parent=31 // pred_region
        _
      $region44: #{masked_l1_loss.1} parent=31 // pred_fallthru
        _
    $region32: #{masked_l1_loss.1} parent=5 // pred_fallthru
      _
    %p305 = scmp.le.s32.totalorder 2, %s11
    // Predicated region
    $region45: #{masked_l1_loss.1} parent=5 // pred_check
      %p306 = pneg %p305
    $region46: #{masked_l1_loss.1} parent=5 // pred_check_branch
      %308 = sbr.rel (%p306) target = $region48
    $region47: #{masked_l1_loss.1} parent=5 // pred_region
      %s309 = ssub.s32 %s11, 2
      // Predicated region
      $region49: #{masked_l1_loss.1} parent=47 // pred_check
        %p310 = pneg %p136
      $region50: #{masked_l1_loss.1} parent=47 // pred_check_branch
        %312 = sbr.rel (%p310) target = $region52
      $region51: #{masked_l1_loss.1} parent=47 // pred_region
        %p313 = scmp.lt.s32.totalorder %s22, 1
        %s314 = scalar_select %p313, %s22, 1
        %s315 = smul.addr %s314, 8
        %s316 = scalar_lea.vmem %s3, %s315
      $region52: #{masked_l1_loss.1} parent=47 // pred_fallthru
        _
      // Predicated region
      $region53: #{masked_l1_loss.1} parent=47 // pred_check
        %p317 = pneg %p162
      $region54: #{masked_l1_loss.1} parent=47 // pred_check_branch
        %319 = sbr.rel (%p317) target = $region56
      $region55: #{masked_l1_loss.1} parent=47 // pred_region
        %p320 = scmp.lt.s32.totalorder %s22, 1
        %s321 = scalar_select %p320, %s22, 1
        %s322 = smul.addr %s321, 8
        %s323 = scalar_lea.vmem %s4, %s322
      $region56: #{masked_l1_loss.1} parent=47 // pred_fallthru
        _
    $region48: #{masked_l1_loss.1} parent=5 // pred_fallthru
      _
  $region6: #{masked_l1_loss.1} parent=0 // loop_footer
    %s15 = sadd.s32 1, %s11
  $region7: #{masked_l1_loss.1} parent=0 // loop_footer_branch
    %10 = sbr.rel target = $region3
  $region8: #{masked_l1_loss.1} parent=0 // loop_exit
    _

</llo_original>
